<compile_context>
chip_gen: v5e
topology: v5e:2x2
jax: 0.10.0
libtpu: 0.0.40
codegen_flags: <defaults>
</compile_context>

<pallas_src>
import functools
import math

import jax
import jax.numpy as jnp
from jax.experimental import pallas as pl
from jax.experimental.pallas import tpu as pltpu


# -----------------------------------------------------------------------------
# Kernel: one grid step == one (self-attention -> BatchNorm1d) layer.
# The output block has a constant index_map, so it stays resident in VMEM
# across the layer axis and acts as the activation carry.
# -----------------------------------------------------------------------------
def _encoder_layer_kernel(x_ref, wqkv_ref, wo_ref, gamma_ref, beta_ref, o_ref,
                          *, B, L, D, eps):
    layer = pl.program_id(0)
    BL = B * L
    inv_n = 1.0 / float(BL)

    # Layer 0 seeds the resident carry from the kernel input.
    @pl.when(layer == 0)
    def _():
        o_ref[...] = x_ref[...]

    x = o_ref[...].astype(jnp.float32)                      # (BL, D)

    wq = wqkv_ref[0, 0]                                     # (D, D); 1/sqrt(D) folded in
    wk = wqkv_ref[0, 1]                                     # (D, D)
    wv = wqkv_ref[0, 2]                                     # (D, D)
    w_out = wo_ref[0]                                       # (D, D)
    gamma = gamma_ref[0]                                    # (1, D)
    beta = beta_ref[0]                                      # (1, D)

    # Three lane-aligned (BL, D) x (D, D) projections (no 3D-wide lane slices).
    q = jnp.dot(x, wq, preferred_element_type=jnp.float32).reshape(B, L, D)
    k = jnp.dot(x, wk, preferred_element_type=jnp.float32).reshape(B, L, D)
    v = jnp.dot(x, wv, preferred_element_type=jnp.float32).reshape(B, L, D)

    # Scaled dot-product attention; the 1/sqrt(D) scale is already in wq.
    s = jnp.einsum("bld,bmd->blm", q, k,
                   preferred_element_type=jnp.float32)      # (B, L, L)
    m = jnp.max(s, axis=-1, keepdims=True)
    p = jnp.exp(s - m)
    p = p / jnp.sum(p, axis=-1, keepdims=True)              # exact softmax

    ctx = jnp.einsum("blm,bmd->bld", p, v,
                     preferred_element_type=jnp.float32)    # (B, L, D)
    y = jnp.dot(ctx.reshape(BL, D), w_out,
                preferred_element_type=jnp.float32)          # (BL, D)

    # BatchNorm1d over (B, L) per channel, training-mode (biased) statistics,
    # numerically-stable two-pass variance.
    mean = jnp.sum(y, axis=0, keepdims=True) * inv_n         # (1, D)
    yc = y - mean
    var = jnp.sum(yc * yc, axis=0, keepdims=True) * inv_n    # (1, D)
    bn_scale = gamma * jax.lax.rsqrt(var + eps)              # (1, D)
    o_ref[...] = (yc * bn_scale + beta).astype(o_ref.dtype)


# -----------------------------------------------------------------------------
# One-time parameter stacking (done at init, NOT per forward call).
# -----------------------------------------------------------------------------
def stack_encoder_params(params):
    """params: list of dicts with wq/wk/wv/wo (D,D) and gamma/beta (D,)."""
    D = params[0]["wq"].shape[0]
    scale = 1.0 / math.sqrt(D)                               # fold into Q weights
    wqkv = jnp.stack(
        [jnp.stack([p["wq"] * scale, p["wk"], p["wv"]]) for p in params])
    wo = jnp.stack([p["wo"] for p in params])
    gamma = jnp.stack([p["gamma"].reshape(1, -1) for p in params])
    beta = jnp.stack([p["beta"].reshape(1, -1) for p in params])
    return wqkv, wo, gamma, beta                              # (NL,3,D,D) (NL,D,D) (NL,1,D) (NL,1,D)


# -----------------------------------------------------------------------------
# EncoderT forward wrapper
# -----------------------------------------------------------------------------
def encoder_forward(x, wqkv, wo, gamma, beta, attn_mask=None, eps=1e-5):
    """x: (B, L, D); wqkv: (NL, 3, D, D); wo: (NL, D, D); gamma/beta: (NL, 1, D)."""
    B, L, D = x.shape
    num_layers = wqkv.shape[0]
    BL = B * L

    out2d = pl.pallas_call(
        functools.partial(_encoder_layer_kernel, B=B, L=L, D=D, eps=eps),
        out_shape=jax.ShapeDtypeStruct((BL, D), x.dtype),
        grid_spec=pltpu.PrefetchScalarGridSpec(
            num_scalar_prefetch=0,
            grid=(num_layers,),
            in_specs=[
                # activations: constant block index -> fetched once
                pl.BlockSpec((BL, D), lambda l: (0, 0)),
                # per-layer weight blocks: auto-prefetched along the layer axis
                pl.BlockSpec((1, 3, D, D), lambda l: (l, 0, 0, 0)),
                pl.BlockSpec((1, D, D), lambda l: (l, 0, 0)),
                pl.BlockSpec((1, 1, D), lambda l: (l, 0, 0)),
                pl.BlockSpec((1, 1, D), lambda l: (l, 0, 0)),
            ],
            # constant index -> VMEM-resident carry across the layer axis
            out_specs=pl.BlockSpec((BL, D), lambda l: (0, 0)),
        ),
        compiler_params=pltpu.CompilerParams(
            dimension_semantics=("arbitrary",)),
    )(x.reshape(BL, D), wqkv, wo, gamma, beta)

    x_out = out2d.reshape(B, L, D)
    # TODO(synk): the generic attn layers modeled here produce no aux loss and
    # do not modify the mask; EncoderT's tuple structure is preserved.
    total_aux_loss = jnp.float32(0.0)
    return x_out, attn_mask, total_aux_loss


# -----------------------------------------------------------------------------
# Pure-JAX f32 reference (PyTorch-equivalent semantics)
# -----------------------------------------------------------------------------
def encoder_forward_ref(x, params, eps=1e-5):
    hp = jax.lax.Precision.HIGHEST
    for p in params:
        q = jnp.dot(x, p["wq"], precision=hp)
        k = jnp.dot(x, p["wk"], precision=hp)
        v = jnp.dot(x, p["wv"], precision=hp)
        s = jnp.einsum("bld,bmd->blm", q, k, precision=hp) / math.sqrt(x.shape[-1])
        a = jax.nn.softmax(s, axis=-1)
        x = jnp.dot(jnp.einsum("blm,bmd->bld", a, v, precision=hp),
                    p["wo"], precision=hp)
        mean = jnp.mean(x, axis=(0, 1), keepdims=True)
        var = jnp.mean((x - mean) ** 2, axis=(0, 1), keepdims=True)
        x = (x - mean) / jnp.sqrt(var + eps) * p["gamma"] + p["beta"]
    return x


if __name__ == "__main__":
    B, L, D = 2, 8, 32           # batch, seq length, d_model
    num_layers = 2

    key = jax.random.PRNGKey(0)
    key, kx = jax.random.split(key)
    x = jax.random.normal(kx, (B, L, D), dtype=jnp.float32)

    params = []
    for _ in range(num_layers):
        key, k1, k2, k3, k4 = jax.random.split(key, 5)
        params.append({
            "wq": 0.1 * jax.random.normal(k1, (D, D), dtype=jnp.float32),
            "wk": 0.1 * jax.random.normal(k2, (D, D), dtype=jnp.float32),
            "wv": 0.1 * jax.random.normal(k3, (D, D), dtype=jnp.float32),
            "wo": 0.1 * jax.random.normal(k4, (D, D), dtype=jnp.float32),
            # nn.BatchNorm1d(affine=True) default init: gamma=1, beta=0
            "gamma": jnp.ones((D,), dtype=jnp.float32),
            "beta": jnp.zeros((D,), dtype=jnp.float32),
        })

    # One-time parameter stacking (1/sqrt(D) folded into wq here).
    wqkv, wo, gamma, beta = stack_encoder_params(params)

    out, attn_masks, total_aux_loss = encoder_forward(x, wqkv, wo, gamma, beta)
    out = jax.block_until_ready(out)

    ref = encoder_forward_ref(x, params)
    assert out.shape == (B, L, D)
    assert not jnp.any(jnp.isnan(out)), "NaN in kernel output"
    # All kernel math is f32 with exact softmax; tolerance only allows for
    # MXU f32 pass-decomposition differences amplified through two BatchNorms.
    assert jnp.allclose(out, ref, atol=1e-2, rtol=1e-2), "mismatch vs reference"

    print("KERNEL_OK")
</pallas_src>

<mosaic_0001>
module attributes {stable_mosaic.version = 11 : i64} {
  func.func @_encoder_layer_kernel(%arg0: i32, %arg1: memref<16x32xf32, #tpu.memory_space<vmem>>, %arg2: memref<1x3x32x32xf32, #tpu.memory_space<vmem>>, %arg3: memref<1x32x32xf32, #tpu.memory_space<vmem>>, %arg4: memref<1x1x32xf32, #tpu.memory_space<vmem>>, %arg5: memref<1x1x32xf32, #tpu.memory_space<vmem>>, %arg6: memref<16x32xf32, #tpu.memory_space<vmem>>) attributes {dimension_semantics = [#tpu.dimension_semantics<arbitrary>], iteration_bounds = array<i64: 2>, scalar_prefetch = 0 : i64, scratch_operands = 0 : i64, tpu.core_type = #tpu.core_type<tc>, window_params = [{pipeline_mode = #tpu.pipeline_mode<synchronous>, transform_indices = @transform_0, window_bounds = array<i64: 16, 32>}, {transform_indices = @transform_1, window_bounds = array<i64: 1, 3, 32, 32>}, {transform_indices = @transform_2, window_bounds = array<i64: 1, 32, 32>}, {transform_indices = @transform_3, window_bounds = array<i64: 1, 1, 32>}, {transform_indices = @transform_4, window_bounds = array<i64: 1, 1, 32>}, {pipeline_mode = #tpu.pipeline_mode<synchronous>, transform_indices = @transform_5, window_bounds = array<i64: 16, 32>}]} {
    %c0_i32 = arith.constant 0 : i32
    %0 = arith.cmpi eq, %arg0, %c0_i32 : i32
    %1 = arith.extui %0 : i1 to i32
    %c0_i32_0 = arith.constant 0 : i32
    %2 = arith.cmpi ne, %1, %c0_i32_0 : i32
    scf.if %2 {
      %c0_35 = arith.constant 0 : index
      %c0_36 = arith.constant 0 : index
      %55 = vector.load %arg1[%c0_35, %c0_36] : memref<16x32xf32, #tpu.memory_space<vmem>>, vector<16x32xf32>
      %c0_37 = arith.constant 0 : index
      %c0_38 = arith.constant 0 : index
      %56 = vector.load %arg6[%c0_37, %c0_38] : memref<16x32xf32, #tpu.memory_space<vmem>>, vector<16x32xf32>
      tpu.vector_store %arg6[%c0_37, %c0_38], %55 {strides = array<i32>} : memref<16x32xf32, #tpu.memory_space<vmem>>, vector<16x32xf32>,
    } else {
    }
    %c0 = arith.constant 0 : index
    %c0_1 = arith.constant 0 : index
    %3 = vector.load %arg6[%c0, %c0_1] : memref<16x32xf32, #tpu.memory_space<vmem>>, vector<16x32xf32>
    %c0_2 = arith.constant 0 : index
    %c0_3 = arith.constant 0 : index
    %c0_4 = arith.constant 0 : index
    %c0_5 = arith.constant 0 : index
    %4 = vector.load %arg2[%c0_2, %c0_3, %c0_4, %c0_5] : memref<1x3x32x32xf32, #tpu.memory_space<vmem>>, vector<1x1x32x32xf32>
    %5 = vector.shape_cast %4 : vector<1x1x32x32xf32> to vector<32x32xf32>
    %c0_6 = arith.constant 0 : index
    %c1 = arith.constant 1 : index
    %c0_7 = arith.constant 0 : index
    %c0_8 = arith.constant 0 : index
    %6 = vector.load %arg2[%c0_6, %c1, %c0_7, %c0_8] : memref<1x3x32x32xf32, #tpu.memory_space<vmem>>, vector<1x1x32x32xf32>
    %7 = vector.shape_cast %6 : vector<1x1x32x32xf32> to vector<32x32xf32>
    %c0_9 = arith.constant 0 : index
    %c2 = arith.constant 2 : index
    %c0_10 = arith.constant 0 : index
    %c0_11 = arith.constant 0 : index
    %8 = vector.load %arg2[%c0_9, %c2, %c0_10, %c0_11] : memref<1x3x32x32xf32, #tpu.memory_space<vmem>>, vector<1x1x32x32xf32>
    %9 = vector.shape_cast %8 : vector<1x1x32x32xf32> to vector<32x32xf32>
    %c0_12 = arith.constant 0 : index
    %c0_13 = arith.constant 0 : index
    %c0_14 = arith.constant 0 : index
    %10 = vector.load %arg3[%c0_12, %c0_13, %c0_14] : memref<1x32x32xf32, #tpu.memory_space<vmem>>, vector<1x32x32xf32>
    %11 = vector.shape_cast %10 : vector<1x32x32xf32> to vector<32x32xf32>
    %c0_15 = arith.constant 0 : index
    %c0_16 = arith.constant 0 : index
    %c0_17 = arith.constant 0 : index
    %12 = vector.load %arg4[%c0_15, %c0_16, %c0_17] : memref<1x1x32xf32, #tpu.memory_space<vmem>>, vector<1x1x32xf32>
    %13 = vector.shape_cast %12 : vector<1x1x32xf32> to vector<1x32xf32>
    %c0_18 = arith.constant 0 : index
    %c0_19 = arith.constant 0 : index
    %c0_20 = arith.constant 0 : index
    %14 = vector.load %arg5[%c0_18, %c0_19, %c0_20] : memref<1x1x32xf32, #tpu.memory_space<vmem>>, vector<1x1x32xf32>
    %15 = vector.shape_cast %14 : vector<1x1x32xf32> to vector<1x32xf32>
    %cst = arith.constant dense<0.000000e+00> : vector<16x32xf32>
    %16 = tpu.matmul %3, %5, %cst {dimension_numbers = #tpu.dot_dimension_numbers<[1], [0], [0], [1], [0, 0, 1, 1], [], []>} : vector<16x32xf32>, vector<32x32xf32>, vector<16x32xf32> -> vector<16x32xf32>
    %17 = vector.shape_cast %16 : vector<16x32xf32> to vector<2x8x32xf32>
    %cst_21 = arith.constant dense<0.000000e+00> : vector<16x32xf32>
    %18 = tpu.matmul %3, %7, %cst_21 {dimension_numbers = #tpu.dot_dimension_numbers<[1], [0], [0], [1], [0, 0, 1, 1], [], []>} : vector<16x32xf32>, vector<32x32xf32>, vector<16x32xf32> -> vector<16x32xf32>
    %19 = vector.shape_cast %18 : vector<16x32xf32> to vector<2x8x32xf32>
    %cst_22 = arith.constant dense<0.000000e+00> : vector<16x32xf32>
    %20 = tpu.matmul %3, %9, %cst_22 {dimension_numbers = #tpu.dot_dimension_numbers<[1], [0], [0], [1], [0, 0, 1, 1], [], []>} : vector<16x32xf32>, vector<32x32xf32>, vector<16x32xf32> -> vector<16x32xf32>
    %21 = vector.shape_cast %20 : vector<16x32xf32> to vector<2x8x32xf32>
    "tpu.trace_start"() <{level = 10 : i32, message = "bld,bmd->blm"}> : () -> ()
    %cst_23 = arith.constant dense<0.000000e+00> : vector<2x8x8xf32>
    %22 = tpu.matmul %17, %19, %cst_23 {dimension_numbers = #tpu.dot_dimension_numbers<[2], [2], [1], [1], [0, 0, 0, 1, 1, 1], [0], [0]>} : vector<2x8x32xf32>, vector<2x8x32xf32>, vector<2x8x8xf32> -> vector<2x8x8xf32>
    "tpu.trace_stop"() : () -> ()
    %cst_24 = arith.constant dense<0xFF800000> : vector<2x8xf32>
    %23 = vector.multi_reduction <maximumf>, %22, %cst_24 [2] : vector<2x8x8xf32> to vector<2x8xf32>
    %24 = vector.shape_cast %23 : vector<2x8xf32> to vector<2x8x1xf32>
    %25 = vector.broadcast %24 : vector<2x8x1xf32> to vector<2x8x8xf32>
    %26 = arith.subf %22, %25 : vector<2x8x8xf32>
    %27 = math.exp %26 : vector<2x8x8xf32>
    %cst_25 = arith.constant dense<0.000000e+00> : vector<2x8xf32>
    %28 = vector.multi_reduction <add>, %27, %cst_25 [2] : vector<2x8x8xf32> to vector<2x8xf32>
    %29 = vector.shape_cast %28 : vector<2x8xf32> to vector<2x8x1xf32>
    %30 = vector.broadcast %29 : vector<2x8x1xf32> to vector<2x8x8xf32>
    %31 = arith.divf %27, %30 : vector<2x8x8xf32>
    "tpu.trace_start"() <{level = 10 : i32, message = "blm,bmd->bld"}> : () -> ()
    %cst_26 = arith.constant dense<0.000000e+00> : vector<2x8x32xf32>
    %32 = tpu.matmul %31, %21, %cst_26 {dimension_numbers = #tpu.dot_dimension_numbers<[2], [1], [1], [2], [0, 0, 0, 1, 1, 2], [0], [0]>} : vector<2x8x8xf32>, vector<2x8x32xf32>, vector<2x8x32xf32> -> vector<2x8x32xf32>
    "tpu.trace_stop"() : () -> ()
    %33 = vector.shape_cast %32 : vector<2x8x32xf32> to vector<16x32xf32>
    %cst_27 = arith.constant dense<0.000000e+00> : vector<16x32xf32>
    %34 = tpu.matmul %33, %11, %cst_27 {dimension_numbers = #tpu.dot_dimension_numbers<[1], [0], [0], [1], [0, 0, 1, 1], [], []>} : vector<16x32xf32>, vector<32x32xf32>, vector<16x32xf32> -> vector<16x32xf32>
    %cst_28 = arith.constant dense<0.000000e+00> : vector<32xf32>
    %35 = vector.multi_reduction <add>, %34, %cst_28 [0] : vector<16x32xf32> to vector<32xf32>
    %36 = vector.shape_cast %35 : vector<32xf32> to vector<1x32xf32>
    %cst_29 = arith.constant 6.250000e-02 : f32
    %37 = vector.broadcast %cst_29 : f32 to vector<1x32xf32>
    %38 = arith.mulf %36, %37 : vector<1x32xf32>
    %39 = vector.broadcast %38 : vector<1x32xf32> to vector<16x32xf32>
    %40 = arith.subf %34, %39 : vector<16x32xf32>
    %41 = arith.mulf %40, %40 : vector<16x32xf32>
    %cst_30 = arith.constant dense<0.000000e+00> : vector<32xf32>
    %42 = vector.multi_reduction <add>, %41, %cst_30 [0] : vector<16x32xf32> to vector<32xf32>
    %43 = vector.shape_cast %42 : vector<32xf32> to vector<1x32xf32>
    %cst_31 = arith.constant 6.250000e-02 : f32
    %44 = vector.broadcast %cst_31 : f32 to vector<1x32xf32>
    %45 = arith.mulf %43, %44 : vector<1x32xf32>
    %cst_32 = arith.constant 9.99999974E-6 : f32
    %46 = vector.broadcast %cst_32 : f32 to vector<1x32xf32>
    %47 = arith.addf %45, %46 : vector<1x32xf32>
    %48 = math.rsqrt %47 : vector<1x32xf32>
    %49 = arith.mulf %13, %48 : vector<1x32xf32>
    %50 = vector.broadcast %49 : vector<1x32xf32> to vector<16x32xf32>
    %51 = arith.mulf %40, %50 : vector<16x32xf32>
    %52 = vector.broadcast %15 : vector<1x32xf32> to vector<16x32xf32>
    %53 = arith.addf %51, %52 : vector<16x32xf32>
    %c0_33 = arith.constant 0 : index
    %c0_34 = arith.constant 0 : index
    %54 = vector.load %arg6[%c0_33, %c0_34] : memref<16x32xf32, #tpu.memory_space<vmem>>, vector<16x32xf32>
    tpu.vector_store %arg6[%c0_33, %c0_34], %53 {strides = array<i32>} : memref<16x32xf32, #tpu.memory_space<vmem>>, vector<16x32xf32>,
    return
  }
  func.func @transform_0(%arg0: i32) -> (i32, i32) {
    %c0_i32 = arith.constant 0 : i32
    %c0_i32_0 = arith.constant 0 : i32
    %c0_i32_1 = arith.constant 0 : i32
    return %c0_i32, %c0_i32_0 : i32, i32
  }
  func.func @transform_1(%arg0: i32) -> (i32, i32, i32, i32) {
    %c0_i32 = arith.constant 0 : i32
    %c0_i32_0 = arith.constant 0 : i32
    %c0_i32_1 = arith.constant 0 : i32
    %c0_i32_2 = arith.constant 0 : i32
    return %arg0, %c0_i32, %c0_i32_0, %c0_i32_1 : i32, i32, i32, i32
  }
  func.func @transform_2(%arg0: i32) -> (i32, i32, i32) {
    %c0_i32 = arith.constant 0 : i32
    %c0_i32_0 = arith.constant 0 : i32
    %c0_i32_1 = arith.constant 0 : i32
    return %arg0, %c0_i32, %c0_i32_0 : i32, i32, i32
  }
  func.func @transform_3(%arg0: i32) -> (i32, i32, i32) {
    %c0_i32 = arith.constant 0 : i32
    %c0_i32_0 = arith.constant 0 : i32
    %c0_i32_1 = arith.constant 0 : i32
    return %arg0, %c0_i32, %c0_i32_0 : i32, i32, i32
  }
  func.func @transform_4(%arg0: i32) -> (i32, i32, i32) {
    %c0_i32 = arith.constant 0 : i32
    %c0_i32_0 = arith.constant 0 : i32
    %c0_i32_1 = arith.constant 0 : i32
    return %arg0, %c0_i32, %c0_i32_0 : i32, i32, i32
  }
  func.func @transform_5(%arg0: i32) -> (i32, i32) {
    %c0_i32 = arith.constant 0 : i32
    %c0_i32_0 = arith.constant 0 : i32
    %c0_i32_1 = arith.constant 0 : i32
    return %c0_i32, %c0_i32_0 : i32, i32
  }
}

</mosaic_0001>

<llo_original>
// kernel: tpu_custom_call.1
$region0: #{tpu_custom_call.1}
  #allocation0 [shape = 'u32[]', space=smem, size = 0x4, offset = 0x4, fixed_abs, tag = 'smem constant byte address 0x4 - core index']
  #allocation1 [shape = 'u32[72,128]{1,0:T(1,128)}', space=vmem, size = 0x9000, scoped, tag = 'internal scratch']
  %s0 = inlined_call_operand.hbm [shape: f32[16,32], index: 0, kind: input, shape index: {}]
  %s1 = inlined_call_operand.hbm [shape: f32[2,3,32,32], index: 1, kind: input, shape index: {}]
  %s2 = inlined_call_operand.hbm [shape: f32[2,32,32], index: 2, kind: input, shape index: {}]
  %s3 = inlined_call_operand.vmem [shape: f32[2,1,32], index: 3, kind: input, shape index: {}]
  %s4 = inlined_call_operand.hbm [shape: f32[2,1,32], index: 4, kind: input, shape index: {}]
  %s5 = inlined_call_operand.hbm [shape: f32[16,32], index: 5, kind: output, shape index: {}]
  %s6 = sld [smem:[#allocation0]]
  $region73: #{tpu_custom_call.1} parent=0
    _
  %s8 = ssub.s32 1, %s6
  %s9 = scalar_select 0, %s8, %s6
  $region1: #{tpu_custom_call.1} parent=0
    #allocation2 [shape = 'u8[8192]{0}', space=vmem, size = 0x2000, scoped, tag = 'input window, operand 0, single buffered']
    #allocation3 [shape = 's32[2]{0}', space=sflag, size = 0x8, scoped, tag = 'scoped memory for tpu_custom_call.1']
    #allocation4 [shape = 's32[2]{0}', space=sflag, size = 0x8, scoped, tag = 'scoped memory for tpu_custom_call.1']
    #allocation5 [shape = 'u8[98304]{0}', space=vmem, size = 0x18000, scoped, tag = 'input window, operand 1']
    #allocation6 [shape = 's32[2]{0}', space=sflag, size = 0x8, scoped, tag = 'scoped memory for tpu_custom_call.1']
    #allocation7 [shape = 'u8[32768]{0}', space=vmem, size = 0x8000, scoped, tag = 'input window, operand 2']
    #allocation8 [shape = 'u8[1024]{0}', space=vmem, size = 0x400, scoped, tag = 'input window, operand 4']
    #allocation9 [shape = 's32[2]{0}', space=sflag, size = 0x8, scoped, tag = 'scoped memory for tpu_custom_call.1']
    #allocation10 [shape = 'u8[8192]{0}', space=vmem, size = 0x2000, scoped, tag = 'output window, operand 0, single buffered']
    %10 = vsyncpa [#allocation3], 0
    %11 = vsyncpa [#allocation6], 0
    %s12 = scalar_lea.sflag [#allocation6], 1
    %13 = vsyncpa %s12, 0
    %14 = vsyncpa [#allocation9], 0
    %s15 = scalar_lea.sflag [#allocation9], 1
    %16 = vsyncpa %s15, 0
    %17 = vsyncpa [#allocation4], 0
    loop: start=0, step=1, limit=4
    $region2: #{tpu_custom_call.1} parent=1 // loop_pre_header
      _
    $region3: #{tpu_custom_call.1} parent=1 // loop_header
      %s19 = sphi 0, %s23
      %p20 = scmp.ge.s32.totalorder %s19, 4
      %s27 = sphi 0, %s27
      %s29 = sphi 0, %s27
      %s30 = sphi 0, %s29
      %s44 = sphi 0, %s30
      %s50 = sphi 0, %s52
      %s53 = sphi 0, %s50
      %s54 = sphi 0, %s53
      %s70 = sphi 0, %s54
      %s76 = sphi 0, %s78
      %s79 = sphi 0, %s76
      %s80 = sphi 0, %s79
      %s96 = sphi 0, %s80
      %s102 = sphi 0, %s104
      %s105 = sphi 0, %s102
      %s106 = sphi 0, %s105
      %s122 = sphi 0, %s106
      %s128 = sphi 0, %s130
      %s131 = sphi 0, %s128
      %s132 = sphi 0, %s131
      %s148 = sphi 0, %s132
      %s152 = sphi 0, %s152
      %s154 = sphi 0, %s152
      %s155 = sphi 0, %s154
      %s169 = sphi 0, %s155
    $region4: #{tpu_custom_call.1} parent=1 // loop_header_branch
      %22 = sbr.rel (%p20) target = $region8
    $region5: #{tpu_custom_call.1} parent=1 // loop_body
      %s24 = ssub.s32 %s19, 1
      %s25 = ssub.s32 %s19, 2
      %s26 = sadd.s32 %s19, 1
      %s28 = sadd.s32 %s27, 1
      %p31 = scmp.eq.s32.totalorder %s19, 1
      %p32 = scmp.ne.s32.totalorder %s27, %s29
      %p33 = scmp.eq.s32.totalorder %s19, 0
      %p34 = por %p32, %p33
      %p35 = scmp.ne.s32.totalorder %s27, %s29
      %p36 = scmp.eq.s32.totalorder %s24, 1
      %p37 = por %p35, %p36
      %p38 = scmp.ne.s32.totalorder %s29, %s30
      %p39 = scmp.eq.s32.totalorder %s24, 0
      %p40 = por %p38, %p39
      %p41 = scmp.ne.s32.totalorder %s29, %s30
      %p42 = scmp.eq.s32.totalorder %s25, 1
      %p43 = por %p41, %p42
      %p45 = scmp.ne.s32.totalorder %s30, %s44
      %p46 = scmp.eq.s32.totalorder %s25, 0
      %p47 = por %p45, %p46
      %s48 = ssub.s32 %s19, %s26
      %p49 = scmp.eq.s32.totalorder %s48, 0
      %s51 = sadd.s32 %s50, 1
      %s52 = scalar_select %p49, %s50, %s51
      %p55 = pneg %p49
      %p56 = scmp.eq.s32.totalorder %s19, 1
      %p57 = por %p55, %p56
      %p58 = scmp.ne.s32.totalorder %s50, %s53
      %p59 = scmp.eq.s32.totalorder %s19, 0
      %p60 = por %p58, %p59
      %p61 = scmp.ne.s32.totalorder %s50, %s53
      %p62 = scmp.eq.s32.totalorder %s24, 1
      %p63 = por %p61, %p62
      %p64 = scmp.ne.s32.totalorder %s53, %s54
      %p65 = scmp.eq.s32.totalorder %s24, 0
      %p66 = por %p64, %p65
      %p67 = scmp.ne.s32.totalorder %s53, %s54
      %p68 = scmp.eq.s32.totalorder %s25, 1
      %p69 = por %p67, %p68
      %p71 = scmp.ne.s32.totalorder %s54, %s70
      %p72 = scmp.eq.s32.totalorder %s25, 0
      %p73 = por %p71, %p72
      %s74 = ssub.s32 %s19, %s26
      %p75 = scmp.eq.s32.totalorder %s74, 0
      %s77 = sadd.s32 %s76, 1
      %s78 = scalar_select %p75, %s76, %s77
      %p81 = pneg %p75
      %p82 = scmp.eq.s32.totalorder %s19, 1
      %p83 = por %p81, %p82
      %p84 = scmp.ne.s32.totalorder %s76, %s79
      %p85 = scmp.eq.s32.totalorder %s19, 0
      %p86 = por %p84, %p85
      %p87 = scmp.ne.s32.totalorder %s76, %s79
      %p88 = scmp.eq.s32.totalorder %s24, 1
      %p89 = por %p87, %p88
      %p90 = scmp.ne.s32.totalorder %s79, %s80
      %p91 = scmp.eq.s32.totalorder %s24, 0
      %p92 = por %p90, %p91
      %p93 = scmp.ne.s32.totalorder %s79, %s80
      %p94 = scmp.eq.s32.totalorder %s25, 1
      %p95 = por %p93, %p94
      %p97 = scmp.ne.s32.totalorder %s80, %s96
      %p98 = scmp.eq.s32.totalorder %s25, 0
      %p99 = por %p97, %p98
      %s100 = ssub.s32 %s19, %s26
      %p101 = scmp.eq.s32.totalorder %s100, 0
      %s103 = sadd.s32 %s102, 1
      %s104 = scalar_select %p101, %s102, %s103
      %p107 = pneg %p101
      %p108 = scmp.eq.s32.totalorder %s19, 1
      %p109 = por %p107, %p108
      %p110 = scmp.ne.s32.totalorder %s102, %s105
      %p111 = scmp.eq.s32.totalorder %s19, 0
      %p112 = por %p110, %p111
      %p113 = scmp.ne.s32.totalorder %s102, %s105
      %p114 = scmp.eq.s32.totalorder %s24, 1
      %p115 = por %p113, %p114
      %p116 = scmp.ne.s32.totalorder %s105, %s106
      %p117 = scmp.eq.s32.totalorder %s24, 0
      %p118 = por %p116, %p117
      %p119 = scmp.ne.s32.totalorder %s105, %s106
      %p120 = scmp.eq.s32.totalorder %s25, 1
      %p121 = por %p119, %p120
      %p123 = scmp.ne.s32.totalorder %s106, %s122
      %p124 = scmp.eq.s32.totalorder %s25, 0
      %p125 = por %p123, %p124
      %s126 = ssub.s32 %s19, %s26
      %p127 = scmp.eq.s32.totalorder %s126, 0
      %s129 = sadd.s32 %s128, 1
      %s130 = scalar_select %p127, %s128, %s129
      %p133 = pneg %p127
      %p134 = scmp.eq.s32.totalorder %s19, 1
      %p135 = por %p133, %p134
      %p136 = scmp.ne.s32.totalorder %s128, %s131
      %p137 = scmp.eq.s32.totalorder %s19, 0
      %p138 = por %p136, %p137
      %p139 = scmp.ne.s32.totalorder %s128, %s131
      %p140 = scmp.eq.s32.totalorder %s24, 1
      %p141 = por %p139, %p140
      %p142 = scmp.ne.s32.totalorder %s131, %s132
      %p143 = scmp.eq.s32.totalorder %s24, 0
      %p144 = por %p142, %p143
      %p145 = scmp.ne.s32.totalorder %s131, %s132
      %p146 = scmp.eq.s32.totalorder %s25, 1
      %p147 = por %p145, %p146
      %p149 = scmp.ne.s32.totalorder %s132, %s148
      %p150 = scmp.eq.s32.totalorder %s25, 0
      %p151 = por %p149, %p150
      %s153 = sadd.s32 %s152, 1
      %p156 = scmp.eq.s32.totalorder %s19, 1
      %p157 = scmp.ne.s32.totalorder %s152, %s154
      %p158 = scmp.eq.s32.totalorder %s19, 0
      %p159 = por %p157, %p158
      %p160 = scmp.ne.s32.totalorder %s152, %s154
      %p161 = scmp.eq.s32.totalorder %s24, 1
      %p162 = por %p160, %p161
      %p163 = scmp.ne.s32.totalorder %s154, %s155
      %p164 = scmp.eq.s32.totalorder %s24, 0
      %p165 = por %p163, %p164
      %p166 = scmp.ne.s32.totalorder %s154, %s155
      %p167 = scmp.eq.s32.totalorder %s25, 1
      %p168 = por %p166, %p167
      %p170 = scmp.ne.s32.totalorder %s155, %s169
      %p171 = scmp.eq.s32.totalorder %s25, 0
      %p172 = por %p170, %p171
      %p173 = scmp.le.s32.totalorder 1, %s19
      %p174 = scmp.lt.s32.totalorder %s19, 3
      %p175 = pnand %p173, %p174
      %p176 = pneg %p175
      // Predicated region
      $region9: #{tpu_custom_call.1} parent=5 // pred_check
        _
      $region10: #{tpu_custom_call.1} parent=5 // pred_check_branch
        %178 = sbr.rel (%p175) target = $region12
      $region11: #{tpu_custom_call.1} parent=5 // pred_region
        %s179 = ssub.s32 %s19, 1
        // Predicated region
        $region13: #{tpu_custom_call.1} parent=11 // pred_check
          %p180 = pneg %p40
        $region14: #{tpu_custom_call.1} parent=11 // pred_check_branch
          %182 = sbr.rel (%p180) target = $region16
        $region15: #{tpu_custom_call.1} parent=11 // pred_region
          %184 = vsyncadd [#allocation3], 0
          %s185 = sshll.u32 %s0, 4
          %s186 = int_to_ptr.hbm [resolvable:$true] %s185
          %s187 = sshll.u32 [#allocation2], 4
          %s188 = int_to_ptr.vmem [resolvable:$true] %s187
          %193 = dma.hbm_to_vmem [thread:$0]  %s186, 256, %s188, [#allocation3], 128, 128, 8
        $region16: #{tpu_custom_call.1} parent=11 // pred_fallthru
          _
      $region12: #{tpu_custom_call.1} parent=5 // pred_fallthru
        _
      %p194 = scmp.lt.s32.totalorder %s19, 2
      // Predicated region
      $region17: #{tpu_custom_call.1} parent=5 // pred_check
        %p195 = pneg %p194
      $region18: #{tpu_custom_call.1} parent=5 // pred_check_branch
        %197 = sbr.rel (%p195) target = $region20
      $region19: #{tpu_custom_call.1} parent=5 // pred_region
        // Predicated region
        $region21: #{tpu_custom_call.1} parent=19 // pred_check
          %p198 = pneg %p60
        $region22: #{tpu_custom_call.1} parent=19 // pred_check_branch
          %200 = sbr.rel (%p198) target = $region24
        $region23: #{tpu_custom_call.1} parent=19 // pred_region
          %s201 = sand.u32 %s19, 1
          %s202 = scalar_lea.sflag [#allocation6], %s201
          %s203 = sand.u32 %s50, 1
          %s204 = smul.addr %s203, 96
          %s205 = scalar_lea.vmem [#allocation5], %s204
          %207 = vsyncadd %s202, 0
          %s208 = smul.addr %s19, 12
          %s209 = smul.addr %s208, 8
          %s210 = scalar_lea.hbm %s1, %s209
          %s211 = sshll.u32 %s210, 4
          %s212 = int_to_ptr.hbm [resolvable:$true] %s211
          %s213 = sshll.u32 %s205, 4
          %s214 = int_to_ptr.vmem [resolvable:$true] %s213
          %219 = dma.hbm_to_vmem [thread:$0]  %s212, 1536, %s214, %s202, 128, 128, 8
        $region24: #{tpu_custom_call.1} parent=19 // pred_fallthru
          _
        // Predicated region
        $region25: #{tpu_custom_call.1} parent=19 // pred_check
          %p220 = pneg %p86
        $region26: #{tpu_custom_call.1} parent=19 // pred_check_branch
          %222 = sbr.rel (%p220) target = $region28
        $region27: #{tpu_custom_call.1} parent=19 // pred_region
          %s223 = sand.u32 %s19, 1
          %s224 = scalar_lea.sflag [#allocation6], %s223
          %s225 = sand.u32 %s76, 1
          %s226 = smul.addr %s225, 32
          %s227 = scalar_lea.vmem [#allocation7], %s226
          %229 = vsyncadd %s224, 0
          %s230 = smul.addr %s19, 4
          %s231 = smul.addr %s230, 8
          %s232 = scalar_lea.hbm %s2, %s231
          %s233 = sshll.u32 %s232, 4
          %s234 = int_to_ptr.hbm [resolvable:$true] %s233
          %s235 = sshll.u32 %s227, 4
          %s236 = int_to_ptr.vmem [resolvable:$true] %s235
          %241 = dma.hbm_to_vmem [thread:$0]  %s234, 512, %s236, %s224, 128, 128, 8
        $region28: #{tpu_custom_call.1} parent=19 // pred_fallthru
          _
        // Predicated region
        $region29: #{tpu_custom_call.1} parent=19 // pred_check
          %p242 = pneg %p112
        $region30: #{tpu_custom_call.1} parent=19 // pred_check_branch
          %244 = sbr.rel (%p242) target = $region32
        $region31: #{tpu_custom_call.1} parent=19 // pred_region
          %p245 = scmp.lt.s32.totalorder %s19, 1
          %s246 = scalar_select %p245, %s19, 1
          %s247 = scalar_lea.vmem %s3, %s246
        $region32: #{tpu_custom_call.1} parent=19 // pred_fallthru
          _
        // Predicated region
        $region33: #{tpu_custom_call.1} parent=19 // pred_check
          %p248 = pneg %p138
        $region34: #{tpu_custom_call.1} parent=19 // pred_check_branch
          %250 = sbr.rel (%p248) target = $region36
        $region35: #{tpu_custom_call.1} parent=19 // pred_region
          %s251 = sand.u32 %s128, 1
          %s252 = scalar_lea.sflag [#allocation9], %s251
          %s253 = sand.u32 %s128, 1
          %s254 = scalar_lea.vmem [#allocation8], %s253
          %256 = vsyncadd %s252, 0
          %s257 = scalar_lea.hbm %s4, %s19
          %s259 = sshll.u32 %s257, 4
          %s260 = int_to_ptr.hbm [resolvable:$true] %s259
          %s261 = sshll.u32 %s254, 4
          %s262 = int_to_ptr.vmem [resolvable:$true] %s261
          %264 = dma.hbm_to_vmem [thread:$0]  %s260, 16, %s262, %s252
        $region36: #{tpu_custom_call.1} parent=19 // pred_fallthru
          _
      $region20: #{tpu_custom_call.1} parent=5 // pred_fallthru
        _
      %p265 = scmp.le.s32.totalorder 1, %s19
      %p266 = scmp.lt.s32.totalorder %s19, 3
      %p267 = pnand %p265, %p266
      %p268 = pneg %p267
      // Predicated region
      $region37: #{tpu_custom_call.1} parent=5 // pred_check
        _
      $region38: #{tpu_custom_call.1} parent=5 // pred_check_branch
        %270 = sbr.rel (%p267) target = $region40
      $region39: #{tpu_custom_call.1} parent=5 // pred_region
        %s271 = ssub.s32 %s19, 1
        // Predicated region
        $region41: #{tpu_custom_call.1} parent=39 // pred_check
          %p272 = pneg %p40
        $region42: #{tpu_custom_call.1} parent=39 // pred_check_branch
          %274 = sbr.rel (%p272) target = $region44
        $region43: #{tpu_custom_call.1} parent=39 // pred_region
          %276 = dma.done [#allocation3], 256
        $region44: #{tpu_custom_call.1} parent=39 // pred_fallthru
          _
        %s277 = sand.u32 %s24, 1
        %s278 = scalar_lea.sflag [#allocation6], %s277
        %s279 = sand.u32 %s53, 1
        %s280 = smul.addr %s279, 96
        %s281 = scalar_lea.vmem [#allocation5], %s280
        // Predicated region
        $region45: #{tpu_custom_call.1} parent=39 // pred_check
          %p282 = pneg %p66
        $region46: #{tpu_custom_call.1} parent=39 // pred_check_branch
          %284 = sbr.rel (%p282) target = $region48
        $region47: #{tpu_custom_call.1} parent=39 // pred_region
          %286 = dma.done %s278, 1536
        $region48: #{tpu_custom_call.1} parent=39 // pred_fallthru
          _
        %s287 = sand.u32 %s24, 1
        %s288 = scalar_lea.sflag [#allocation6], %s287
        %s289 = sand.u32 %s79, 1
        %s290 = smul.addr %s289, 32
        %s291 = scalar_lea.vmem [#allocation7], %s290
        // Predicated region
        $region49: #{tpu_custom_call.1} parent=39 // pred_check
          %p292 = pneg %p92
        $region50: #{tpu_custom_call.1} parent=39 // pred_check_branch
          %294 = sbr.rel (%p292) target = $region52
        $region51: #{tpu_custom_call.1} parent=39 // pred_region
          %296 = dma.done %s288, 512
        $region52: #{tpu_custom_call.1} parent=39 // pred_fallthru
          _
        %s297 = sand.u32 %s131, 1
        %s298 = scalar_lea.sflag [#allocation9], %s297
        %s299 = sand.u32 %s131, 1
        %s300 = scalar_lea.vmem [#allocation8], %s299
        // Predicated region
        $region53: #{tpu_custom_call.1} parent=39 // pred_check
          %p301 = pneg %p144
        $region54: #{tpu_custom_call.1} parent=39 // pred_check_branch
          %303 = sbr.rel (%p301) target = $region56
        $region55: #{tpu_custom_call.1} parent=39 // pred_region
          %305 = dma.done %s298, 16
        $region56: #{tpu_custom_call.1} parent=39 // pred_fallthru
          _
        %p306 = pneg %p40
        %p307 = pneg %p37
        %s308 = sand.u32 %s24, 1
        %s309 = scalar_lea.sflag [#allocation6], %s308
        %s310 = sand.u32 %s53, 1
        %s311 = smul.addr %s310, 96
        %s312 = scalar_lea.vmem [#allocation5], %s311
        %p313 = pneg %p66
        %p314 = pneg %p63
        %s315 = sand.u32 %s24, 1
        %s316 = scalar_lea.sflag [#allocation6], %s315
        %s317 = sand.u32 %s79, 1
        %s318 = smul.addr %s317, 32
        %s319 = scalar_lea.vmem [#allocation7], %s318
        %p320 = pneg %p92
        %p321 = pneg %p89
        %p322 = scmp.lt.s32.totalorder %s24, 1
        %s323 = scalar_select %p322, %s24, 1
        %s324 = scalar_lea.vmem %s3, %s323
        %p325 = pneg %p118
        %p326 = pneg %p115
        %s327 = sand.u32 %s131, 1
        %s328 = scalar_lea.sflag [#allocation9], %s327
        %s329 = sand.u32 %s131, 1
        %s330 = scalar_lea.vmem [#allocation8], %s329
        %p331 = pneg %p144
        %p332 = pneg %p141
        %p333 = pneg %p165
        %p334 = pneg %p162
        %p335 = scmp.lt.s32.totalorder %s24, 1
        %s336 = scalar_select %p335, %s24, 1
        %s337 = scalar_lea.vmem %s3, %s336
        %p338 = scmp.eq.s32.totalorder %s24, 0
        // Predicated region
        $region57: #{tpu_custom_call.1} parent=39 // pred_check
          %p339 = pneg %p338
        $region58: #{tpu_custom_call.1} parent=39 // pred_check_branch
          %341 = sbr.rel (%p339) target = $region60
        $region59: #{tpu_custom_call.1} parent=39 // pred_region
          %v342 = vld [vmem:[#allocation2] sm:$0xff]
          %v343 = vld [vmem:[#allocation2 + $0x8] sm:$0xff]
          %vm344 = vcmask 261120
          %345 = vst.msk [vmem:[#allocation10] sm:$0xff] %vm344, %v342
          %346 = vst.msk [vmem:[#allocation10 + $0x8] sm:$0xff] %vm344, %v343
        $region60: #{tpu_custom_call.1} parent=39 // pred_fallthru
          _
        %v347 = vld [vmem:[#allocation10] sm:$0xff]
        %v348 = vld [vmem:[#allocation10 + $0x8] sm:$0xff]
        %v349 = vld [vmem:[%s281] sm:$0xff]
        %v350 = vld [vmem:[%s281 + $0x8] sm:$0xff]
        %v351 = vld [vmem:[%s281 + $0x10] sm:$0xff]
        %v352 = vld [vmem:[%s281 + $0x18] sm:$0xff]
        %s353 = scalar_lea.vmem %s281, 32 [#allocation5]
        %v354 = vld [vmem:[%s353] sm:$0xff]
        %v355 = vld [vmem:[%s353 + $0x8] sm:$0xff]
        %v356 = vld [vmem:[%s353 + $0x10] sm:$0xff]
        %v357 = vld [vmem:[%s353 + $0x18] sm:$0xff]
        %s358 = scalar_lea.vmem %s281, 64 [#allocation5]
        %v359 = vld [vmem:[%s358] sm:$0xff]
        %v360 = vld [vmem:[%s358 + $0x8] sm:$0xff]
        %v361 = vld [vmem:[%s358 + $0x10] sm:$0xff]
        %v362 = vld [vmem:[%s358 + $0x18] sm:$0xff]
        %v363 = vld [vmem:[%s291] sm:$0xff]
        %v364 = vld [vmem:[%s291 + $0x8] sm:$0xff]
        %v365 = vld [vmem:[%s291 + $0x10] sm:$0xff]
        %v366 = vld [vmem:[%s291 + $0x18] sm:$0xff]
        %v367 = vld [vmem:[%s337] sm:$0x1]
        %v368 = vld [vmem:[%s300] sm:$0x1]
        %vm369 = vcmask 261120
        %v371 = vsel %vm369, %v347, 0
        %v374 = vsel %vm369, %v348, 0
        %376 = vmatpush.msra.mxu0 0.0
        %377 = vmatpush.msra.mxu0 0.0
        %378 = vmatpush.msra.mxu0 0.0
        %379 = vmatpush.msra.mxu0 0.0
        %380 = vmatpush.msra.mxu0 0.0
        %381 = vmatpush.msra.mxu0 0.0
        %382 = vmatpush.msra.mxu0 0.0
        %383 = vmatpush.msra.mxu0 0.0
        %384 = vmatpush.msra.mxu0 0.0
        %385 = vmatpush.msra.mxu0 0.0
        %386 = vmatpush.msra.mxu0 0.0
        %387 = vmatpush.msra.mxu0 0.0
        %388 = vmatpush.msra.mxu0 %v352
        %389 = vmatpush.msra.mxu0 %v351
        %390 = vmatpush.msra.mxu0 %v350
        %391 = vmatpush.msra.mxu0 %v349
        %392 = vmatmul.f32.gmra.mxu0 %v371
        %v393 = vpop.f32.mrf.mxu0
        %v394 = vadd.f32 0.0, %v393
        %395 = vmatmul.f32.gmra.mxu0 %v374
        %v396 = vpop.f32.mrf.mxu0
        %v397 = vadd.f32 0.0, %v396
        %398 = vdwg.mxu0
        %399 = vmatpush.msra.mxu0 0.0
        %400 = vmatpush.msra.mxu0 0.0
        %401 = vmatpush.msra.mxu0 0.0
        %402 = vmatpush.msra.mxu0 0.0
        %403 = vmatpush.msra.mxu0 0.0
        %404 = vmatpush.msra.mxu0 0.0
        %405 = vmatpush.msra.mxu0 0.0
        %406 = vmatpush.msra.mxu0 0.0
        %407 = vmatpush.msra.mxu0 0.0
        %408 = vmatpush.msra.mxu0 0.0
        %409 = vmatpush.msra.mxu0 0.0
        %410 = vmatpush.msra.mxu0 0.0
        %411 = vmatpush.msra.mxu0 %v357
        %412 = vmatpush.msra.mxu0 %v356
        %413 = vmatpush.msra.mxu0 %v355
        %414 = vmatpush.msra.mxu0 %v354
        %415 = vmatmul.f32.gmra.mxu0 %v371
        %v416 = vpop.f32.mrf.mxu0
        %v417 = vadd.f32 0.0, %v416
        %418 = vmatmul.f32.gmra.mxu0 %v374
        %v419 = vpop.f32.mrf.mxu0
        %v420 = vadd.f32 0.0, %v419
        %421 = vdwg.mxu0
        %422 = vmatpush.msra.mxu0 0.0
        %423 = vmatpush.msra.mxu0 0.0
        %424 = vmatpush.msra.mxu0 0.0
        %425 = vmatpush.msra.mxu0 0.0
        %426 = vmatpush.msra.mxu0 0.0
        %427 = vmatpush.msra.mxu0 0.0
        %428 = vmatpush.msra.mxu0 0.0
        %429 = vmatpush.msra.mxu0 0.0
        %430 = vmatpush.msra.mxu0 0.0
        %431 = vmatpush.msra.mxu0 0.0
        %432 = vmatpush.msra.mxu0 0.0
        %433 = vmatpush.msra.mxu0 0.0
        %434 = vmatpush.msra.mxu0 %v362
        %435 = vmatpush.msra.mxu0 %v361
        %436 = vmatpush.msra.mxu0 %v360
        %437 = vmatpush.msra.mxu0 %v359
        %438 = vmatmul.f32.gmra.mxu0 %v371
        %v439 = vpop.f32.mrf.mxu0
        %v440 = vadd.f32 0.0, %v439
        %441 = vmatmul.f32.gmra.mxu0 %v374
        %v442 = vpop.f32.mrf.mxu0
        %v443 = vadd.f32 0.0, %v442
        %444 = vdwg.mxu0
        %v446 = vsel %vm369, %v394, 0
        %v449 = vsel %vm369, %v417, 0
        %451 = vmatpush.xpose.msra.mxu0 0.0
        %452 = vmatpush.xpose.msra.mxu0 0.0
        %453 = vmatpush.xpose.msra.mxu0 0.0
        %454 = vmatpush.xpose.msra.mxu0 0.0
        %455 = vmatpush.xpose.msra.mxu0 0.0
        %456 = vmatpush.xpose.msra.mxu0 0.0
        %457 = vmatpush.xpose.msra.mxu0 0.0
        %458 = vmatpush.xpose.msra.mxu0 0.0
        %459 = vmatpush.xpose.msra.mxu0 0.0
        %460 = vmatpush.xpose.msra.mxu0 0.0
        %461 = vmatpush.xpose.msra.mxu0 0.0
        %462 = vmatpush.xpose.msra.mxu0 0.0
        %463 = vmatpush.xpose.msra.mxu0 0.0
        %464 = vmatpush.xpose.msra.mxu0 0.0
        %465 = vmatpush.xpose.msra.mxu0 0.0
        %466 = vmatpush.xpose.msra.mxu0 %v449
        %467 = vmatmul.f32.gmra.mxu0 %v446
        %v468 = vpop.f32.mrf.mxu0
        %v469 = vadd.f32 0.0, %v468
        %470 = vdwg.mxu0
        %v472 = vsel %vm369, %v397, 0
        %v475 = vsel %vm369, %v420, 0
        %477 = vmatpush.xpose.msra.mxu0 0.0
        %478 = vmatpush.xpose.msra.mxu0 0.0
        %479 = vmatpush.xpose.msra.mxu0 0.0
        %480 = vmatpush.xpose.msra.mxu0 0.0
        %481 = vmatpush.xpose.msra.mxu0 0.0
        %482 = vmatpush.xpose.msra.mxu0 0.0
        %483 = vmatpush.xpose.msra.mxu0 0.0
        %484 = vmatpush.xpose.msra.mxu0 0.0
        %485 = vmatpush.xpose.msra.mxu0 0.0
        %486 = vmatpush.xpose.msra.mxu0 0.0
        %487 = vmatpush.xpose.msra.mxu0 0.0
        %488 = vmatpush.xpose.msra.mxu0 0.0
        %489 = vmatpush.xpose.msra.mxu0 0.0
        %490 = vmatpush.xpose.msra.mxu0 0.0
        %491 = vmatpush.xpose.msra.mxu0 0.0
        %492 = vmatpush.xpose.msra.mxu0 %v475
        %493 = vmatmul.f32.gmra.mxu0 %v472
        %v494 = vpop.f32.mrf.mxu0
        %v495 = vadd.f32 0.0, %v494
        %496 = vdwg.mxu0
        %vm497 = vcmask 64512
        %v498 = vsel %vm497, %v469, -inf
        %499 = vmax.xlane.f32.xlu0 %v498
        %v500 = vpop.xlane.xlu0 %499
        %v501 = vsel %vm497, %v495, -inf
        %502 = vmax.xlane.f32.xlu0 %v501
        %v503 = vpop.xlane.xlu0 %502
        %v504 = vsub.f32 %v469, %v500
        %v505 = vsub.f32 %v495, %v503
        %v506 = vmul.f32 %v504, 1.442695
        %v507 = vpow.pop %v506
        %v508 = vmul.f32 %v505, 1.442695
        %v509 = vpow.pop %v508
        %v510 = vsel %vm497, %v507, 0.0
        %511 = vadd.xlane.f32.xlu0 %v510
        %v512 = vpop.xlane.xlu0 %511
        %v513 = vsel %vm497, %v509, 0.0
        %514 = vadd.xlane.f32.xlu0 %v513
        %v515 = vpop.xlane.xlu0 %514
        %v516 = vrcp.pop %v512
        %v517 = vmul.f32 %v512, %v516
        %v518 = vsub.f32 1.0, %v517
        %v519 = vmul.f32 %v516, %v518
        %v520 = vadd.f32 %v516, %v519
        %vm521 = vweird.f32 %v512
        %vm522 = vweird.f32 %v516
        %vm523 = vmor %vm521, %vm522
        %v524 = vsel %vm523, %v516, %v520
        %v525 = vand.u32 2147483647, %v512
        %vm526 = vcmp.eq.f32.partialorder %v525, 8.507059e+37
        %v527 = vand.u32 %v512, 2147483648
        %v528 = vor.u32 1.1754944e-38, %v527
        %v529 = vsel %vm526, %v528, %v524
        %v530 = vmul.f32 %v507, %v529
        %v531 = vrcp.pop %v515
        %v532 = vmul.f32 %v515, %v531
        %v533 = vsub.f32 1.0, %v532
        %v534 = vmul.f32 %v531, %v533
        %v535 = vadd.f32 %v531, %v534
        %vm536 = vweird.f32 %v515
        %vm537 = vweird.f32 %v531
        %vm538 = vmor %vm536, %vm537
        %v539 = vsel %vm538, %v531, %v535
        %v540 = vand.u32 2147483647, %v515
        %vm541 = vcmp.eq.f32.partialorder %v540, 8.507059e+37
        %v542 = vand.u32 %v515, 2147483648
        %v543 = vor.u32 1.1754944e-38, %v542
        %v544 = vsel %vm541, %v543, %v539
        %v545 = vmul.f32 %v509, %v544
        %v547 = vsel %vm497, %v530, 0
        %549 = vmatpush.msra.mxu0 0.0
        %550 = vmatpush.msra.mxu0 0.0
        %551 = vmatpush.msra.mxu0 0.0
        %552 = vmatpush.msra.mxu0 0.0
        %553 = vmatpush.msra.mxu0 0.0
        %554 = vmatpush.msra.mxu0 0.0
        %555 = vmatpush.msra.mxu0 0.0
        %556 = vmatpush.msra.mxu0 0.0
        %557 = vmatpush.msra.mxu0 0.0
        %558 = vmatpush.msra.mxu0 0.0
        %559 = vmatpush.msra.mxu0 0.0
        %560 = vmatpush.msra.mxu0 0.0
        %561 = vmatpush.msra.mxu0 0.0
        %562 = vmatpush.msra.mxu0 0.0
        %563 = vmatpush.msra.mxu0 0.0
        %564 = vmatpush.msra.mxu0 %v440
        %565 = vmatmul.f32.gmra.mxu0 %v547
        %v566 = vpop.f32.mrf.mxu0
        %v567 = vadd.f32 0.0, %v566
        %568 = vdwg.mxu0
        %v570 = vsel %vm497, %v545, 0
        %572 = vmatpush.msra.mxu0 0.0
        %573 = vmatpush.msra.mxu0 0.0
        %574 = vmatpush.msra.mxu0 0.0
        %575 = vmatpush.msra.mxu0 0.0
        %576 = vmatpush.msra.mxu0 0.0
        %577 = vmatpush.msra.mxu0 0.0
        %578 = vmatpush.msra.mxu0 0.0
        %579 = vmatpush.msra.mxu0 0.0
        %580 = vmatpush.msra.mxu0 0.0
        %581 = vmatpush.msra.mxu0 0.0
        %582 = vmatpush.msra.mxu0 0.0
        %583 = vmatpush.msra.mxu0 0.0
        %584 = vmatpush.msra.mxu0 0.0
        %585 = vmatpush.msra.mxu0 0.0
        %586 = vmatpush.msra.mxu0 0.0
        %587 = vmatpush.msra.mxu0 %v443
        %588 = vmatmul.f32.gmra.mxu0 %v570
        %v589 = vpop.f32.mrf.mxu0
        %v590 = vadd.f32 0.0, %v589
        %591 = vdwg.mxu0
        %v593 = vsel %vm369, %v567, 0
        %v596 = vsel %vm369, %v590, 0
        %598 = vmatpush.msra.mxu0 0.0
        %599 = vmatpush.msra.mxu0 0.0
        %600 = vmatpush.msra.mxu0 0.0
        %601 = vmatpush.msra.mxu0 0.0
        %602 = vmatpush.msra.mxu0 0.0
        %603 = vmatpush.msra.mxu0 0.0
        %604 = vmatpush.msra.mxu0 0.0
        %605 = vmatpush.msra.mxu0 0.0
        %606 = vmatpush.msra.mxu0 0.0
        %607 = vmatpush.msra.mxu0 0.0
        %608 = vmatpush.msra.mxu0 0.0
        %609 = vmatpush.msra.mxu0 0.0
        %610 = vmatpush.msra.mxu0 %v366
        %611 = vmatpush.msra.mxu0 %v365
        %612 = vmatpush.msra.mxu0 %v364
        %613 = vmatpush.msra.mxu0 %v363
        %614 = vmatmul.f32.gmra.mxu0 %v593
        %v615 = vpop.f32.mrf.mxu0
        %v616 = vadd.f32 0.0, %v615
        %617 = vmatmul.f32.gmra.mxu0 %v596
        %v618 = vpop.f32.mrf.mxu0
        %v619 = vadd.f32 0.0, %v618
        %620 = vdwg.mxu0
        %v621 = vsel %vm369, %v616, 0.0
        %v622 = vsel %vm369, %v619, 0.0
        %v623 = vadd.f32 %v621, %v622
        %v624 = vrot.slane %v623, 4
        %v625 = vadd.f32 %v623, %v624
        %v626 = vrot.slane %v625, 2
        %v627 = vadd.f32 %v625, %v626
        %v628 = vrot.slane %v627, 1
        %v629 = vadd.f32 %v627, %v628
        %v630 = vmul.f32 %v629, 0.0625
        %v631 = vsub.f32 %v616, %v630
        %v632 = vsub.f32 %v619, %v630
        %v633 = vmul.f32 %v631, %v631
        %v634 = vmul.f32 %v632, %v632
        %v635 = vsel %vm369, %v633, 0.0
        %v636 = vsel %vm369, %v634, 0.0
        %v637 = vadd.f32 %v635, %v636
        %v638 = vrot.slane %v637, 4
        %v639 = vadd.f32 %v637, %v638
        %v640 = vrot.slane %v639, 2
        %v641 = vadd.f32 %v639, %v640
        %v642 = vrot.slane %v641, 1
        %v643 = vadd.f32 %v641, %v642
        %v644 = vmul.f32 %v643, 0.0625
        %v645 = vadd.f32 %v644, 1e-05
        %v646 = vrsqrt.pop %v645
        %v647 = vmul.f32 %v646, %v645
        %v648 = vmul.f32 %v647, %v646
        %v649 = vmul.f32 0.5, %v648
        %v650 = vsub.f32 1.5, %v649
        %v651 = vmul.f32 %v646, %v650
        %vm652 = vweird.f32 %v645
        %vm653 = vweird.f32 %v646
        %vm654 = vmor %vm652, %vm653
        %v655 = vsel %vm654, %v646, %v651
        %v656 = vmul.f32 %v367, %v655
        %v658 = vperm.slane %v656, 0
        %v660 = vmul.f32 %v631, %v658
        %v661 = vmul.f32 %v632, %v658
        %v663 = vperm.slane %v368, 0
        %v665 = vadd.f32 %v660, %v663
        %v666 = vadd.f32 %v661, %v663
        %667 = vst.msk [vmem:[#allocation10] sm:$0xff] %vm369, %v665
        %668 = vst.msk [vmem:[#allocation10 + $0x8] sm:$0xff] %vm369, %v666
        // Predicated region
        $region61: #{tpu_custom_call.1} parent=39 // pred_check
          %p669 = pneg %p162
        $region62: #{tpu_custom_call.1} parent=39 // pred_check_branch
          %671 = sbr.rel (%p669) target = $region64
        $region63: #{tpu_custom_call.1} parent=39 // pred_region
          %673 = vsyncadd [#allocation4], 0
          %s674 = sshll.u32 [#allocation10], 4
          %s675 = int_to_ptr.vmem [resolvable:$true] %s674
          %s676 = sshll.u32 %s5, 4
          %s677 = int_to_ptr.hbm [resolvable:$true] %s676
          %682 = dma.vmem_to_hbm [thread:$0]  %s675, 256, %s677, [#allocation4], 128, 128, 8
        $region64: #{tpu_custom_call.1} parent=39 // pred_fallthru
          _
        // Predicated region
        $region65: #{tpu_custom_call.1} parent=39 // pred_check
          %p683 = pneg %p162
        $region66: #{tpu_custom_call.1} parent=39 // pred_check_branch
          %685 = sbr.rel (%p683) target = $region68
        $region67: #{tpu_custom_call.1} parent=39 // pred_region
          %687 = dma.done [#allocation4], 256
        $region68: #{tpu_custom_call.1} parent=39 // pred_fallthru
          _
      $region40: #{tpu_custom_call.1} parent=5 // pred_fallthru
        _
      %p688 = scmp.le.s32.totalorder 2, %s19
      // Predicated region
      $region69: #{tpu_custom_call.1} parent=5 // pred_check
        %p689 = pneg %p688
      $region70: #{tpu_custom_call.1} parent=5 // pred_check_branch
        %691 = sbr.rel (%p689) target = $region72
      $region71: #{tpu_custom_call.1} parent=5 // pred_region
        %s692 = ssub.s32 %s19, 2
      $region72: #{tpu_custom_call.1} parent=5 // pred_fallthru
        _
    $region6: #{tpu_custom_call.1} parent=1 // loop_footer
      %s23 = sadd.s32 1, %s19
    $region7: #{tpu_custom_call.1} parent=1 // loop_footer_branch
      %18 = sbr.rel target = $region3
    $region8: #{tpu_custom_call.1} parent=1 // loop_exit
      _
    %693 = vsyncpa [#allocation3], 1
    %s694 = scalar_lea.sflag [#allocation3], 1
    %695 = vsyncpa %s694, 1
    %696 = vsyncpa [#allocation6], 1
    %s697 = scalar_lea.sflag [#allocation6], 1
    %698 = vsyncpa %s697, 1
    %699 = vsyncpa [#allocation9], 1
    %s700 = scalar_lea.sflag [#allocation9], 1
    %701 = vsyncpa %s700, 1
    %702 = vsyncpa [#allocation4], 1
    %s703 = scalar_lea.sflag [#allocation4], 1
    %704 = vsyncpa %s703, 1

</llo_original>
